<compile_context>
chip_gen: v7x
topology: tpu7x:2x2x1
jax: 0.10.0
libtpu: 0.0.40
codegen_flags: <defaults>
</compile_context>

<pallas_src>
import functools

import jax
import jax.numpy as jnp
from jax import lax
from jax.experimental import pallas as pl
from jax.experimental.pallas import tpu as pltpu

# ----- fixed hyper-params of the ResNet18 stem ------------------------------
KH = KW = 7
CONV_STRIDE = 2
CONV_PAD = 3
CIN = 3
COUT = 64
POOL_K = 3
POOL_S = 2
POOL_P = 1
BN_EPS = 1e-5

_VMEM_LIMIT = 32 * 1024 * 1024  # safe on v5e/v6e (128 MiB) and v7x (64 MiB)


# ----------------------------- Pallas kernels -------------------------------
def _conv_bn_relu_kernel(a_ref, w_ref, b_ref, o_ref):
    """Fused im2col GEMM conv + folded-BN bias + ReLU for one row tile.

    a: (TB, 294) bf16 pixel-pair patches, w: (294, 128) bf16 block-diagonal weight
    (BN scale folded in), b: (1, 128) f32.  Output (TB, 128) bf16 is the lane-dense
    row-major view of two NHWC pixels (2 x 64 channels) per row.
    """
    acc = jnp.dot(a_ref[...], w_ref[...], preferred_element_type=jnp.float32)
    o_ref[...] = jnp.maximum(acc + b_ref[...], 0.0).astype(o_ref.dtype)


def _maxpool_kernel(x_ref, halo_ref, o_ref, hm_ref, *, w2, rt, chunk):
    """3x3 / stride-2 / pad-1 max pool on the lane-dense pixel-pair layout.

    x_ref:    (2*rt*w2, 128) bf16 -- 2*rt input image rows; each array row holds
              the pixel pair (2j, 2j+1) as lanes [0:64] / [64:128].
    halo_ref: (w2, 128) bf16      -- the image row just above the tile (clamped).
    o_ref:    (rt*w2, 64) bf16    -- rt pooled output rows (w2 columns each).
    hm_ref:   ((2*rt+1)*w2, 64)   -- horizontally pooled rows (halo row first).
    Edge handling uses window clipping (equivalent to -inf padding for max).
    """

    def hmax(xb):
        a = xb[:, :COUT]                                  # input column 2j
        b = xb[:, COUT:]                                  # input column 2j+1
        left = jnp.concatenate([b[:1], b[:-1]], axis=0)   # input column 2j-1
        ridx = lax.broadcasted_iota(jnp.int32, (xb.shape[0], 1), 0)
        left = jnp.where((ridx % w2) == 0, a, left)       # clip at column 0
        return jnp.maximum(a, jnp.maximum(b, left))

    # ---- pass 1: horizontal 3-max centred on even columns (chunked) ----
    hm_ref[pl.ds(0, w2)] = hmax(halo_ref[...])
    nrows = 2 * rt
    r0 = 0
    while r0 < nrows:
        rc = min(chunk, nrows - r0)
        hm_ref[pl.ds((r0 + 1) * w2, rc * w2)] = hmax(x_ref[pl.ds(r0 * w2, rc * w2)])
        r0 += rc

    # ---- pass 2: vertical 3-max centred on even rows ----
    for r in range(rt):
        top = hm_ref[pl.ds(2 * r * w2, w2)]            # image row 2r-1 (halo at r=0)
        mid = hm_ref[pl.ds((2 * r + 1) * w2, w2)]      # image row 2r
        bot = hm_ref[pl.ds((2 * r + 2) * w2, w2)]      # image row 2r+1
        o_ref[pl.ds(r * w2, w2)] = jnp.maximum(
            top, jnp.maximum(mid, bot)).astype(o_ref.dtype)


# ------------------------------- wrappers ------------------------------------
def _pick_conv_row_tile(ho, wo2, n, target_rows=8192, min_steps=4):
    """Largest divisor of ho with (t*wo2) a multiple of 8 and <= target_rows,
    preferring at least `min_steps` grid steps for pipelining / megacore."""
    cands = [t for t in range(1, ho + 1)
             if ho % t == 0 and (t * wo2) % 8 == 0 and t * wo2 <= target_rows]
    if not cands:
        raise ValueError(f"unsupported conv output shape for tiling: ho={ho} wo2={wo2}")
    good = [t for t in cands if (n * ho) // t >= min_steps]
    return max(good) if good else max(cands)


def _pick_pool_row_tile(h2, n, min_steps=8):
    cands = [t for t in range(1, h2 + 1) if h2 % t == 0]
    good = [t for t in cands if n * (h2 // t) >= min_steps]
    return max(good) if good else 1


def conv_bn_relu(x_nchw, conv_w, scale, bias):
    """conv7x7/s2/p3 + folded-BN + ReLU.

    Returns a lane-dense (n*ho*wo//2, 128) bf16 array which is the exact row-major
    bit layout of the NHWC (n, ho, wo, 64) activation (two pixels per row)."""
    n, cin, h, w = x_nchw.shape
    assert cin == CIN, cin
    ho = (h + 2 * CONV_PAD - KH) // CONV_STRIDE + 1
    wo = (w + 2 * CONV_PAD - KW) // CONV_STRIDE + 1
    assert wo % 2 == 0, wo
    wo2 = wo // 2
    kdim = KH * KW * CIN
    k2 = 2 * kdim

    # --- XLA glue: NCHW -> NHWC bf16, pad, pixel-pair im2col ---------------------
    # TODO(synk): patch formation still happens in XLA; allow_input_fusion below
    # invites XLA to fuse it into the input DMA instead of materializing it.
    x = jnp.transpose(x_nchw, (0, 2, 3, 1)).astype(jnp.bfloat16)
    xp = jnp.pad(x, ((0, 0), (CONV_PAD, CONV_PAD), (CONV_PAD, CONV_PAD), (0, 0)))
    taps_e, taps_o = [], []
    for ky in range(KH):
        rows = xp[:, ky:ky + 2 * ho - 1:2, :, :]
        for kx in range(KW):
            # even output col 2j  -> input col 4j + kx
            taps_e.append(rows[:, :, kx:kx + 4 * wo2 - 3:4, :])
            # odd  output col 2j+1 -> input col 4j + 2 + kx
            taps_o.append(rows[:, :, kx + 2:kx + 2 + 4 * wo2 - 3:4, :])
    patches2 = jnp.concatenate(taps_e + taps_o, axis=-1).reshape(n * ho * wo2, k2)

    # weight (Cout,Cin,KH,KW) -> (147,64); fold BN scale; block-diagonal (294,128)
    wmat = jnp.transpose(conv_w, (2, 3, 1, 0)).reshape(kdim, COUT) * scale[None, :]
    zeros = jnp.zeros_like(wmat)
    w2mat = jnp.concatenate(
        [jnp.concatenate([wmat, zeros], axis=1),
         jnp.concatenate([zeros, wmat], axis=1)], axis=0).astype(jnp.bfloat16)
    b2 = jnp.concatenate([bias, bias]).reshape(1, 2 * COUT).astype(jnp.float32)

    tr = _pick_conv_row_tile(ho, wo2, n)      # output image rows per grid step
    tb = tr * wo2                             # GEMM rows (pixel pairs) per grid step
    num_tiles = (n * ho) // tr

    out = pl.pallas_call(
        _conv_bn_relu_kernel,
        out_shape=jax.ShapeDtypeStruct((n * ho * wo2, 2 * COUT), jnp.bfloat16),
        grid_spec=pltpu.PrefetchScalarGridSpec(
            num_scalar_prefetch=0,
            grid=(num_tiles,),
            in_specs=[
                pl.BlockSpec((tb, k2), lambda i: (i, 0)),
                pl.BlockSpec((k2, 2 * COUT), lambda i: (0, 0)),   # resident weights
                pl.BlockSpec((1, 2 * COUT), lambda i: (0, 0)),    # resident bias
            ],
            out_specs=pl.BlockSpec((tb, 2 * COUT), lambda i: (i, 0)),
        ),
        compiler_params=pltpu.CompilerParams(
            dimension_semantics=("parallel",),
            vmem_limit_bytes=_VMEM_LIMIT,
            allow_input_fusion=(True, False, False)),
    )(patches2, w2mat, b2)
    return out, ho, wo


def maxpool_3x3_s2(y_pairs, n, ho, wo):
    """3x3/s2/p1 max pool on the lane-dense conv output. Returns (n,h2,w2,64) bf16."""
    assert ho % 2 == 0 and wo % 2 == 0, (ho, wo)
    h2, w2 = ho // 2, wo // 2
    assert w2 % 8 == 0, "pool kernel needs conv output width that is a multiple of 16"
    rt = _pick_pool_row_tile(h2, n)           # pooled output rows per grid step
    tiles_per_img = h2 // rt
    chunk = max(1, min(2 * rt, 512 // w2))    # pass-1 image rows per step (~128 KiB)

    kernel = functools.partial(_maxpool_kernel, w2=w2, rt=rt, chunk=chunk)
    out = pl.pallas_call(
        kernel,
        out_shape=jax.ShapeDtypeStruct((n * h2 * w2, COUT), jnp.bfloat16),
        grid_spec=pltpu.PrefetchScalarGridSpec(
            num_scalar_prefetch=0,
            grid=(n, tiles_per_img),
            in_specs=[
                # main tile: 2*rt input image rows of image b
                pl.BlockSpec((2 * rt * w2, 2 * COUT),
                             lambda b, j: (b * tiles_per_img + j, 0)),
                # 1-image-row halo above the tile (clamped at the top edge); this is
                # a second view of the same array.
                pl.BlockSpec((w2, 2 * COUT),
                             lambda b, j: (b * ho + jnp.maximum(2 * rt * j - 1, 0), 0)),
            ],
            out_specs=pl.BlockSpec((rt * w2, COUT),
                                   lambda b, j: (b * tiles_per_img + j, 0)),
            scratch_shapes=[pltpu.VMEM(((2 * rt + 1) * w2, COUT), jnp.bfloat16)],
        ),
        compiler_params=pltpu.CompilerParams(
            dimension_semantics=("parallel", "parallel"),
            vmem_limit_bytes=_VMEM_LIMIT),
    )(y_pairs, y_pairs)
    return out.reshape(n, h2, w2, COUT)


@jax.jit
def vision_processor_forward(x_nchw, conv_w, scale, bias):
    y_pairs, ho, wo = conv_bn_relu(x_nchw, conv_w, scale, bias)
    n = x_nchw.shape[0]
    y = maxpool_3x3_s2(y_pairs, n, ho, wo)               # (N, Ho/2, Wo/2, 64) bf16
    # TODO(synk): the NHWC->NCHW f32 relayout is kept only to match the PyTorch
    # module's output convention; drop it if the consumer accepts NHWC bf16.
    return jnp.transpose(y, (0, 3, 1, 2)).astype(jnp.float32)


# ----------------------------- plain-JAX reference ---------------------------
def reference_forward(x_nchw, conv_w, scale, bias):
    y = jax.lax.conv_general_dilated(
        x_nchw, conv_w, (CONV_STRIDE, CONV_STRIDE),
        [(CONV_PAD, CONV_PAD), (CONV_PAD, CONV_PAD)],
        dimension_numbers=("NCHW", "OIHW", "NCHW"))
    y = y * scale[None, :, None, None] + bias[None, :, None, None]
    y = jnp.maximum(y, 0.0)
    y = jax.lax.reduce_window(
        y, -jnp.inf, jax.lax.max,
        (1, 1, POOL_K, POOL_K), (1, 1, POOL_S, POOL_S),
        [(0, 0), (0, 0), (POOL_P, POOL_P), (POOL_P, POOL_P)])
    return y


# ------------------------------------ main -----------------------------------
if __name__ == "__main__":
    key = jax.random.PRNGKey(0)
    kx, kw, kg, kb, km, kv = jax.random.split(key, 6)

    # small but shape-consistent with the ResNet stem (Cin must be 3)
    N, H, W = 2, 32, 32
    x = jax.random.normal(kx, (N, CIN, H, W), jnp.float32)

    # deterministic synthetic parameters (shapes match resnet18 conv1 / bn1)
    conv_w = 0.05 * jax.random.normal(kw, (COUT, CIN, KH, KW), jnp.float32)
    gamma = 1.0 + 0.1 * jax.random.normal(kg, (COUT,), jnp.float32)
    beta = 0.1 * jax.random.normal(kb, (COUT,), jnp.float32)
    running_mean = 0.1 * jax.random.normal(km, (COUT,), jnp.float32)
    running_var = jnp.abs(jax.random.normal(kv, (COUT,), jnp.float32)) + 0.5

    # eval-mode BatchNorm folded into an affine scale/bias
    # TODO(synk): training-mode BN (batch statistics) is not reproduced; the
    # frozen-feature-extractor (eval) semantics are implemented instead.
    scale = gamma / jnp.sqrt(running_var + BN_EPS)
    bias = beta - running_mean * scale

    y = vision_processor_forward(x, conv_w, scale, bias)
    y = jax.block_until_ready(y)

    ref = reference_forward(x, conv_w, scale, bias)
    assert y.shape == ref.shape == (N, COUT, H // 4, W // 4), (y.shape, ref.shape)
    assert jnp.allclose(y, ref, atol=2e-2, rtol=2e-2), float(jnp.max(jnp.abs(y - ref)))

    print("KERNEL_OK")
</pallas_src>

<mosaic_0001>
module attributes {stable_mosaic.version = 11 : i64} {
  func.func @_maxpool_kernel(%arg0: i32, %arg1: i32, %arg2: memref<32x128xbf16, #tpu.memory_space<vmem>>, %arg3: memref<8x128xbf16, #tpu.memory_space<vmem>>, %arg4: memref<16x64xbf16, #tpu.memory_space<vmem>>, %arg5: memref<40x64xbf16, #tpu.memory_space<vmem>>) attributes {dimension_semantics = [#tpu.dimension_semantics<parallel>, #tpu.dimension_semantics<parallel>], iteration_bounds = array<i64: 2, 4>, scalar_prefetch = 0 : i64, scratch_operands = 1 : i64, tpu.core_type = #tpu.core_type<tc>, window_params = [{transform_indices = @transform_0, window_bounds = array<i64: 32, 128>}, {transform_indices = @transform_1, window_bounds = array<i64: 8, 128>}, {transform_indices = @transform_2, window_bounds = array<i64: 16, 64>}]} {
    %c0 = arith.constant 0 : index
    %c0_0 = arith.constant 0 : index
    %0 = vector.load %arg3[%c0, %c0_0] : memref<8x128xbf16, #tpu.memory_space<vmem>>, vector<8x128xbf16>
    %1 = vector.extract_strided_slice %0 {offsets = [0, 0], sizes = [8, 64], strides = [1, 1]} : vector<8x128xbf16> to vector<8x64xbf16>
    %2 = vector.extract_strided_slice %0 {offsets = [0, 64], sizes = [8, 64], strides = [1, 1]} : vector<8x128xbf16> to vector<8x64xbf16>
    %3 = vector.extract_strided_slice %2 {offsets = [0, 0], sizes = [1, 64], strides = [1, 1]} : vector<8x64xbf16> to vector<1x64xbf16>
    %4 = vector.extract_strided_slice %2 {offsets = [0, 0], sizes = [7, 64], strides = [1, 1]} : vector<8x64xbf16> to vector<7x64xbf16>
    %5 = tpu.concatenate %3, %4 in 0 : vector<1x64xbf16>, vector<7x64xbf16> -> vector<8x64xbf16>
    %6 = tpu.iota {dimensions = array<i32: 0>} : vector<8x1xi32>
    %c8_i32 = arith.constant 8 : i32
    %c0_i32 = arith.constant 0 : i32
    %7 = arith.cmpi eq, %c8_i32, %c0_i32 : i32
    %c1_i32 = arith.constant 1 : i32
    %8 = arith.select %7, %c1_i32, %c8_i32 : i32
    %9 = vector.broadcast %8 : i32 to vector<8x1xi32>
    %10 = arith.remsi %6, %9 : vector<8x1xi32>
    %c0_i32_1 = arith.constant 0 : i32
    %11 = vector.broadcast %c0_i32_1 : i32 to vector<8x1xi32>
    %12 = arith.cmpi ne, %10, %11 : vector<8x1xi32>
    %c0_i32_2 = arith.constant 0 : i32
    %13 = vector.broadcast %c0_i32_2 : i32 to vector<8x1xi32>
    %14 = arith.cmpi slt, %10, %13 : vector<8x1xi32>
    %c0_i32_3 = arith.constant 0 : i32
    %15 = arith.cmpi slt, %8, %c0_i32_3 : i32
    %16 = vector.broadcast %15 : i1 to vector<8x1xi1>
    %17 = vector.broadcast %16 : vector<8x1xi1> to vector<8x1xi1>
    %18 = arith.xori %14, %17 : vector<8x1xi1>
    %19 = arith.andi %18, %12 : vector<8x1xi1>
    %20 = vector.broadcast %8 : i32 to vector<8x1xi32>
    %21 = arith.addi %10, %20 : vector<8x1xi32>
    %22 = arith.select %19, %21, %10 : vector<8x1xi1>, vector<8x1xi32>
    %c0_i32_4 = arith.constant 0 : i32
    %23 = vector.broadcast %c0_i32_4 : i32 to vector<8x1xi32>
    %24 = arith.cmpi eq, %22, %23 : vector<8x1xi32>
    %25 = vector.shape_cast %24 : vector<8x1xi1> to vector<8x1xi1>
    %26 = vector.broadcast %25 : vector<8x1xi1> to vector<8x64xi1>
    %27 = arith.select %26, %1, %5 : vector<8x64xi1>, vector<8x64xbf16>
    %28 = arith.maximumf %2, %27 : vector<8x64xbf16>
    %29 = arith.maximumf %1, %28 : vector<8x64xbf16>
    %c0_5 = arith.constant 0 : index
    %c0_6 = arith.constant 0 : index
    %30 = vector.load %arg5[%c0_5, %c0_6] : memref<40x64xbf16, #tpu.memory_space<vmem>>, vector<8x64xbf16>
    tpu.vector_store %arg5[%c0_5, %c0_6], %29 {strides = array<i32>} : memref<40x64xbf16, #tpu.memory_space<vmem>>, vector<8x64xbf16>,
    %c0_7 = arith.constant 0 : index
    %c0_8 = arith.constant 0 : index
    %31 = vector.load %arg2[%c0_7, %c0_8] : memref<32x128xbf16, #tpu.memory_space<vmem>>, vector<32x128xbf16>
    %32 = vector.extract_strided_slice %31 {offsets = [0, 0], sizes = [32, 64], strides = [1, 1]} : vector<32x128xbf16> to vector<32x64xbf16>
    %33 = vector.extract_strided_slice %31 {offsets = [0, 64], sizes = [32, 64], strides = [1, 1]} : vector<32x128xbf16> to vector<32x64xbf16>
    %34 = vector.extract_strided_slice %33 {offsets = [0, 0], sizes = [1, 64], strides = [1, 1]} : vector<32x64xbf16> to vector<1x64xbf16>
    %35 = vector.extract_strided_slice %33 {offsets = [0, 0], sizes = [31, 64], strides = [1, 1]} : vector<32x64xbf16> to vector<31x64xbf16>
    %36 = tpu.concatenate %34, %35 in 0 : vector<1x64xbf16>, vector<31x64xbf16> -> vector<32x64xbf16>
    %37 = tpu.iota {dimensions = array<i32: 0>} : vector<32x1xi32>
    %c8_i32_9 = arith.constant 8 : i32
    %c0_i32_10 = arith.constant 0 : i32
    %38 = arith.cmpi eq, %c8_i32_9, %c0_i32_10 : i32
    %c1_i32_11 = arith.constant 1 : i32
    %39 = arith.select %38, %c1_i32_11, %c8_i32_9 : i32
    %40 = vector.broadcast %39 : i32 to vector<32x1xi32>
    %41 = arith.remsi %37, %40 : vector<32x1xi32>
    %c0_i32_12 = arith.constant 0 : i32
    %42 = vector.broadcast %c0_i32_12 : i32 to vector<32x1xi32>
    %43 = arith.cmpi ne, %41, %42 : vector<32x1xi32>
    %c0_i32_13 = arith.constant 0 : i32
    %44 = vector.broadcast %c0_i32_13 : i32 to vector<32x1xi32>
    %45 = arith.cmpi slt, %41, %44 : vector<32x1xi32>
    %c0_i32_14 = arith.constant 0 : i32
    %46 = arith.cmpi slt, %39, %c0_i32_14 : i32
    %47 = vector.broadcast %46 : i1 to vector<32x1xi1>
    %48 = vector.broadcast %47 : vector<32x1xi1> to vector<32x1xi1>
    %49 = arith.xori %45, %48 : vector<32x1xi1>
    %50 = arith.andi %49, %43 : vector<32x1xi1>
    %51 = vector.broadcast %39 : i32 to vector<32x1xi32>
    %52 = arith.addi %41, %51 : vector<32x1xi32>
    %53 = arith.select %50, %52, %41 : vector<32x1xi1>, vector<32x1xi32>
    %c0_i32_15 = arith.constant 0 : i32
    %54 = vector.broadcast %c0_i32_15 : i32 to vector<32x1xi32>
    %55 = arith.cmpi eq, %53, %54 : vector<32x1xi32>
    %56 = vector.shape_cast %55 : vector<32x1xi1> to vector<32x1xi1>
    %57 = vector.broadcast %56 : vector<32x1xi1> to vector<32x64xi1>
    %58 = arith.select %57, %32, %36 : vector<32x64xi1>, vector<32x64xbf16>
    %59 = arith.maximumf %33, %58 : vector<32x64xbf16>
    %60 = arith.maximumf %32, %59 : vector<32x64xbf16>
    %c8 = arith.constant 8 : index
    %c0_16 = arith.constant 0 : index
    %61 = vector.load %arg5[%c8, %c0_16] : memref<40x64xbf16, #tpu.memory_space<vmem>>, vector<32x64xbf16>
    tpu.vector_store %arg5[%c8, %c0_16], %60 {strides = array<i32>} : memref<40x64xbf16, #tpu.memory_space<vmem>>, vector<32x64xbf16>,
    %c0_17 = arith.constant 0 : index
    %c0_18 = arith.constant 0 : index
    %62 = vector.load %arg5[%c0_17, %c0_18] : memref<40x64xbf16, #tpu.memory_space<vmem>>, vector<8x64xbf16>
    %c8_19 = arith.constant 8 : index
    %c0_20 = arith.constant 0 : index
    %63 = vector.load %arg5[%c8_19, %c0_20] : memref<40x64xbf16, #tpu.memory_space<vmem>>, vector<8x64xbf16>
    %c16 = arith.constant 16 : index
    %c0_21 = arith.constant 0 : index
    %64 = vector.load %arg5[%c16, %c0_21] : memref<40x64xbf16, #tpu.memory_space<vmem>>, vector<8x64xbf16>
    %65 = arith.maximumf %63, %64 : vector<8x64xbf16>
    %66 = arith.maximumf %62, %65 : vector<8x64xbf16>
    %c0_22 = arith.constant 0 : index
    %c0_23 = arith.constant 0 : index
    %67 = vector.load %arg4[%c0_22, %c0_23] : memref<16x64xbf16, #tpu.memory_space<vmem>>, vector<8x64xbf16>
    tpu.vector_store %arg4[%c0_22, %c0_23], %66 {strides = array<i32>} : memref<16x64xbf16, #tpu.memory_space<vmem>>, vector<8x64xbf16>,
    %c16_24 = arith.constant 16 : index
    %c0_25 = arith.constant 0 : index
    %68 = vector.load %arg5[%c16_24, %c0_25] : memref<40x64xbf16, #tpu.memory_space<vmem>>, vector<8x64xbf16>
    %c24 = arith.constant 24 : index
    %c0_26 = arith.constant 0 : index
    %69 = vector.load %arg5[%c24, %c0_26] : memref<40x64xbf16, #tpu.memory_space<vmem>>, vector<8x64xbf16>
    %c32 = arith.constant 32 : index
    %c0_27 = arith.constant 0 : index
    %70 = vector.load %arg5[%c32, %c0_27] : memref<40x64xbf16, #tpu.memory_space<vmem>>, vector<8x64xbf16>
    %71 = arith.maximumf %69, %70 : vector<8x64xbf16>
    %72 = arith.maximumf %68, %71 : vector<8x64xbf16>
    %c8_28 = arith.constant 8 : index
    %c0_29 = arith.constant 0 : index
    %73 = vector.load %arg4[%c8_28, %c0_29] : memref<16x64xbf16, #tpu.memory_space<vmem>>, vector<8x64xbf16>
    tpu.vector_store %arg4[%c8_28, %c0_29], %72 {strides = array<i32>} : memref<16x64xbf16, #tpu.memory_space<vmem>>, vector<8x64xbf16>,
    return
  }
  func.func @transform_0(%arg0: i32, %arg1: i32) -> (i32, i32) {
    %c4_i32 = arith.constant 4 : i32
    %0 = arith.muli %arg0, %c4_i32 : i32
    %1 = arith.addi %0, %arg1 : i32
    %c0_i32 = arith.constant 0 : i32
    %c0_i32_0 = arith.constant 0 : i32
    return %1, %c0_i32 : i32, i32
  }
  func.func @transform_1(%arg0: i32, %arg1: i32) -> (i32, i32) {
    %c16_i32 = arith.constant 16 : i32
    %0 = arith.muli %arg0, %c16_i32 : i32
    %c4_i32 = arith.constant 4 : i32
    %1 = arith.muli %c4_i32, %arg1 : i32
    %c1_i32 = arith.constant 1 : i32
    %2 = arith.subi %1, %c1_i32 : i32
    %c0_i32 = arith.constant 0 : i32
    %3 = arith.maxsi %2, %c0_i32 : i32
    %4 = arith.addi %0, %3 : i32
    %c0_i32_0 = arith.constant 0 : i32
    %c0_i32_1 = arith.constant 0 : i32
    return %4, %c0_i32_0 : i32, i32
  }
  func.func @transform_2(%arg0: i32, %arg1: i32) -> (i32, i32) {
    %c4_i32 = arith.constant 4 : i32
    %0 = arith.muli %arg0, %c4_i32 : i32
    %1 = arith.addi %0, %arg1 : i32
    %c0_i32 = arith.constant 0 : i32
    %c0_i32_0 = arith.constant 0 : i32
    return %1, %c0_i32 : i32, i32
  }
}

module attributes {stable_mosaic.version = 11 : i64} {
  func.func @_conv_bn_relu_kernel(%arg0: i32, %arg1: memref<64x294xbf16, #tpu.memory_space<vmem>>, %arg2: memref<294x128xbf16, #tpu.memory_space<vmem>>, %arg3: memref<1x128xf32, #tpu.memory_space<vmem>>, %arg4: memref<64x128xbf16, #tpu.memory_space<vmem>>) attributes {dimension_semantics = [#tpu.dimension_semantics<parallel>], iteration_bounds = array<i64: 4>, scalar_prefetch = 0 : i64, scratch_operands = 0 : i64, tpu.core_type = #tpu.core_type<tc>, window_params = [{transform_indices = @transform_0, window_bounds = array<i64: 64, 294>}, {pipeline_mode = #tpu.pipeline_mode<synchronous>, transform_indices = @transform_1, window_bounds = array<i64: 294, 128>}, {pipeline_mode = #tpu.pipeline_mode<synchronous>, transform_indices = @transform_2, window_bounds = array<i64: 1, 128>}, {transform_indices = @transform_3, window_bounds = array<i64: 64, 128>}]} {
    %c0 = arith.constant 0 : index
    %c0_0 = arith.constant 0 : index
    %0 = vector.load %arg1[%c0, %c0_0] : memref<64x294xbf16, #tpu.memory_space<vmem>>, vector<64x294xbf16>
    %c0_1 = arith.constant 0 : index
    %c0_2 = arith.constant 0 : index
    %1 = vector.load %arg2[%c0_1, %c0_2] : memref<294x128xbf16, #tpu.memory_space<vmem>>, vector<294x128xbf16>
    %cst = arith.constant dense<0.000000e+00> : vector<64x128xf32>
    %2 = tpu.matmul %0, %1, %cst {dimension_numbers = #tpu.dot_dimension_numbers<[1], [0], [0], [1], [0, 0, 1, 1], [], []>} : vector<64x294xbf16>, vector<294x128xbf16>, vector<64x128xf32> -> vector<64x128xf32>
    %c0_3 = arith.constant 0 : index
    %c0_4 = arith.constant 0 : index
    %3 = vector.load %arg3[%c0_3, %c0_4] : memref<1x128xf32, #tpu.memory_space<vmem>>, vector<1x128xf32>
    %4 = vector.broadcast %3 : vector<1x128xf32> to vector<64x128xf32>
    %5 = arith.addf %2, %4 : vector<64x128xf32>
    %cst_5 = arith.constant 0.000000e+00 : f32
    %6 = vector.broadcast %cst_5 : f32 to vector<64x128xf32>
    %7 = arith.maximumf %5, %6 : vector<64x128xf32>
    %8 = arith.truncf %7 : vector<64x128xf32> to vector<64x128xbf16>
    %c0_6 = arith.constant 0 : index
    %c0_7 = arith.constant 0 : index
    %9 = vector.load %arg4[%c0_6, %c0_7] : memref<64x128xbf16, #tpu.memory_space<vmem>>, vector<64x128xbf16>
    tpu.vector_store %arg4[%c0_6, %c0_7], %8 {strides = array<i32>} : memref<64x128xbf16, #tpu.memory_space<vmem>>, vector<64x128xbf16>,
    return
  }
  func.func @transform_0(%arg0: i32) -> (i32, i32) {
    %c0_i32 = arith.constant 0 : i32
    %c0_i32_0 = arith.constant 0 : i32
    return %arg0, %c0_i32 : i32, i32
  }
  func.func @transform_1(%arg0: i32) -> (i32, i32) {
    %c0_i32 = arith.constant 0 : i32
    %c0_i32_0 = arith.constant 0 : i32
    %c0_i32_1 = arith.constant 0 : i32
    return %c0_i32, %c0_i32_0 : i32, i32
  }
  func.func @transform_2(%arg0: i32) -> (i32, i32) {
    %c0_i32 = arith.constant 0 : i32
    %c0_i32_0 = arith.constant 0 : i32
    %c0_i32_1 = arith.constant 0 : i32
    return %c0_i32, %c0_i32_0 : i32, i32
  }
  func.func @transform_3(%arg0: i32) -> (i32, i32) {
    %c0_i32 = arith.constant 0 : i32
    %c0_i32_0 = arith.constant 0 : i32
    return %arg0, %c0_i32 : i32, i32
  }
}

</mosaic_0001>

<llo_original>
// kernel: vision_processor_forward.3
$region0: #{vision_processor_forward.3}
  #allocation0 [shape = 'u32[]', space=smem, size = 0x4, offset = 0x4, fixed_abs, tag = 'smem constant byte address 0x4 - core index']
  #allocation1 [shape = 'u32[144,128]{1,0:T(1,128)}', space=vmem, size = 0x12000, scoped, tag = 'internal scratch']
  #allocation2 [shape = 'bf16[40,64]{1,0:T(8,128)(2,1)}', space=vmem, size = 0x2800, scoped, tag = 'scratch operand']
  %s0 = inlined_call_operand.vmem [shape: bf16[256,128], index: 0, kind: input, shape index: {}, may-alias: {0,1}]
  %s1 = inlined_call_operand.vmem [shape: bf16[256,128], index: 1, kind: input, shape index: {}, may-alias: {0,1}]
  %s2 = inlined_call_operand.vmem [shape: bf16[128,64], index: 2, kind: output, shape index: {}]
  %s3 = sld [smem:[#allocation0]]
  $region41: #{vision_processor_forward.3} parent=0
    _
  %s5 = ssub.s32 1, %s3
  %s6 = scalar_select 0, %s5, %s3
  loop: start=0, step=1, limit=10
  $region2: #{vision_processor_forward.3} parent=0 // loop_pre_header
    _
  $region3: #{vision_processor_forward.3} parent=0 // loop_header
    %s8 = sphi 0, %s12
    %p9 = scmp.ge.s32.totalorder %s8, 10
    %s15 = sphi 0, %s27
    %s16 = sphi 0, %s23
    %s17 = sphi 0, %s15
    %s18 = sphi 0, %s16
    %s19 = sphi 0, %s17
    %s20 = sphi 0, %s18
    %s34 = sphi 0, %s36
    %s37 = sphi 0, %s34
    %s38 = sphi 0, %s37
    %s54 = sphi 0, %s38
    %s72 = sphi 0, %s74
    %s75 = sphi 0, %s72
    %s76 = sphi 0, %s75
    %s92 = sphi 0, %s76
    %s102 = sphi 0, %s104
    %s105 = sphi 0, %s102
    %s106 = sphi 0, %s105
    %s122 = sphi 0, %s106
  $region4: #{vision_processor_forward.3} parent=0 // loop_header_branch
    %11 = sbr.rel (%p9) target = $region8
  $region5: #{vision_processor_forward.3} parent=0 // loop_body
    %s13 = ssub.s32 %s8, 1
    %s14 = ssub.s32 %s8, 2
    %s21 = sadd.s32 1, %s16
    %p22 = scmp.ge.s32.totalorder %s21, 4
    %s23 = scalar_select %p22, 0, %s21
    %s24 = sadd.s32 1, %s15
    %s25 = scalar_select %p22, %s24, %s15
    %p26 = scmp.ge.s32.totalorder %s25, 2
    %s27 = scalar_select %p26, 0, %s25
    %s28 = smul.u32 %s15, 4
    %s29 = sadd.s32 %s28, %s16
    %s30 = smul.u32 %s27, 4
    %s31 = sadd.s32 %s30, %s23
    %s32 = ssub.s32 %s29, %s31
    %p33 = scmp.eq.s32.totalorder %s32, 0
    %s35 = sadd.s32 %s34, 1
    %s36 = scalar_select %p33, %s34, %s35
    %p39 = pneg %p33
    %p40 = scmp.eq.s32.totalorder %s8, 7
    %p41 = por %p39, %p40
    %p42 = scmp.ne.s32.totalorder %s34, %s37
    %p43 = scmp.eq.s32.totalorder %s8, 0
    %p44 = por %p42, %p43
    %p45 = scmp.ne.s32.totalorder %s34, %s37
    %p46 = scmp.eq.s32.totalorder %s13, 7
    %p47 = por %p45, %p46
    %p48 = scmp.ne.s32.totalorder %s37, %s38
    %p49 = scmp.eq.s32.totalorder %s13, 0
    %p50 = por %p48, %p49
    %p51 = scmp.ne.s32.totalorder %s37, %s38
    %p52 = scmp.eq.s32.totalorder %s14, 7
    %p53 = por %p51, %p52
    %p55 = scmp.ne.s32.totalorder %s38, %s54
    %p56 = scmp.eq.s32.totalorder %s14, 0
    %p57 = por %p55, %p56
    %s58 = smul.u32 %s15, 16
    %s59 = smul.u32 %s16, 4
    %s60 = ssub.s32 %s59, 1
    %p61 = scmp.gt.s32.totalorder %s60, 0
    %s62 = scalar_select %p61, %s60, 0
    %s63 = sadd.s32 %s58, %s62
    %s64 = smul.u32 %s27, 16
    %s65 = smul.u32 %s23, 4
    %s66 = ssub.s32 %s65, 1
    %p67 = scmp.gt.s32.totalorder %s66, 0
    %s68 = scalar_select %p67, %s66, 0
    %s69 = sadd.s32 %s64, %s68
    %s70 = ssub.s32 %s63, %s69
    %p71 = scmp.eq.s32.totalorder %s70, 0
    %s73 = sadd.s32 %s72, 1
    %s74 = scalar_select %p71, %s72, %s73
    %p77 = pneg %p71
    %p78 = scmp.eq.s32.totalorder %s8, 7
    %p79 = por %p77, %p78
    %p80 = scmp.ne.s32.totalorder %s72, %s75
    %p81 = scmp.eq.s32.totalorder %s8, 0
    %p82 = por %p80, %p81
    %p83 = scmp.ne.s32.totalorder %s72, %s75
    %p84 = scmp.eq.s32.totalorder %s13, 7
    %p85 = por %p83, %p84
    %p86 = scmp.ne.s32.totalorder %s75, %s76
    %p87 = scmp.eq.s32.totalorder %s13, 0
    %p88 = por %p86, %p87
    %p89 = scmp.ne.s32.totalorder %s75, %s76
    %p90 = scmp.eq.s32.totalorder %s14, 7
    %p91 = por %p89, %p90
    %p93 = scmp.ne.s32.totalorder %s76, %s92
    %p94 = scmp.eq.s32.totalorder %s14, 0
    %p95 = por %p93, %p94
    %s96 = smul.u32 %s15, 4
    %s97 = sadd.s32 %s96, %s16
    %s98 = smul.u32 %s27, 4
    %s99 = sadd.s32 %s98, %s23
    %s100 = ssub.s32 %s97, %s99
    %p101 = scmp.eq.s32.totalorder %s100, 0
    %s103 = sadd.s32 %s102, 1
    %s104 = scalar_select %p101, %s102, %s103
    %p107 = pneg %p101
    %p108 = scmp.eq.s32.totalorder %s8, 7
    %p109 = por %p107, %p108
    %p110 = scmp.ne.s32.totalorder %s102, %s105
    %p111 = scmp.eq.s32.totalorder %s8, 0
    %p112 = por %p110, %p111
    %p113 = scmp.ne.s32.totalorder %s102, %s105
    %p114 = scmp.eq.s32.totalorder %s13, 7
    %p115 = por %p113, %p114
    %p116 = scmp.ne.s32.totalorder %s105, %s106
    %p117 = scmp.eq.s32.totalorder %s13, 0
    %p118 = por %p116, %p117
    %p119 = scmp.ne.s32.totalorder %s105, %s106
    %p120 = scmp.eq.s32.totalorder %s14, 7
    %p121 = por %p119, %p120
    %p123 = scmp.ne.s32.totalorder %s106, %s122
    %p124 = scmp.eq.s32.totalorder %s14, 0
    %p125 = por %p123, %p124
    %p126 = scmp.le.s32.totalorder 1, %s8
    %p127 = scmp.lt.s32.totalorder %s8, 9
    %p128 = pnand %p126, %p127
    %p129 = pneg %p128
    // Predicated region
    $region9: #{vision_processor_forward.3} parent=5 // pred_check
      _
    $region10: #{vision_processor_forward.3} parent=5 // pred_check_branch
      %131 = sbr.rel (%p128) target = $region12
    $region11: #{vision_processor_forward.3} parent=5 // pred_region
      %s132 = ssub.s32 %s8, 1
    $region12: #{vision_processor_forward.3} parent=5 // pred_fallthru
      _
    %p133 = scmp.lt.s32.totalorder %s8, 8
    // Predicated region
    $region13: #{vision_processor_forward.3} parent=5 // pred_check
      %p134 = pneg %p133
    $region14: #{vision_processor_forward.3} parent=5 // pred_check_branch
      %136 = sbr.rel (%p134) target = $region16
    $region15: #{vision_processor_forward.3} parent=5 // pred_region
      // Predicated region
      $region17: #{vision_processor_forward.3} parent=15 // pred_check
        %p137 = pneg %p44
      $region18: #{vision_processor_forward.3} parent=15 // pred_check_branch
        %139 = sbr.rel (%p137) target = $region20
      $region19: #{vision_processor_forward.3} parent=15 // pred_region
        %s140 = smul.u32 %s15, 4
        %s141 = sadd.s32 %s140, %s16
        %s142 = smul.u32 4, %s141
        %p143 = scmp.lt.s32.totalorder %s142, 31
        %s144 = scalar_select %p143, %s142, 31
        %s145 = smul.addr %s144, 4
        %s146 = scalar_lea.vmem %s0, %s145
        %s147 = smul.u32 %s15, 4
        %s148 = sadd.s32 %s147, %s16
        %s149 = smul.u32 4, %s148
      $region20: #{vision_processor_forward.3} parent=15 // pred_fallthru
        _
      // Predicated region
      $region21: #{vision_processor_forward.3} parent=15 // pred_check
        %p150 = pneg %p82
      $region22: #{vision_processor_forward.3} parent=15 // pred_check_branch
        %152 = sbr.rel (%p150) target = $region24
      $region23: #{vision_processor_forward.3} parent=15 // pred_region
        %s153 = smul.u32 %s15, 16
        %s154 = smul.u32 %s16, 4
        %s155 = ssub.s32 %s154, 1
        %p156 = scmp.gt.s32.totalorder %s155, 0
        %s157 = scalar_select %p156, %s155, 0
        %s158 = sadd.s32 %s153, %s157
        %p159 = scmp.lt.s32.totalorder %s158, 31
        %s160 = scalar_select %p159, %s158, 31
        %s161 = smul.addr %s160, 4
        %s162 = scalar_lea.vmem %s1, %s161
        %s163 = smul.u32 %s15, 16
        %s164 = smul.u32 %s16, 4
        %s165 = ssub.s32 %s164, 1
        %p166 = scmp.gt.s32.totalorder %s165, 0
        %s167 = scalar_select %p166, %s165, 0
        %s168 = sadd.s32 %s163, %s167
      $region24: #{vision_processor_forward.3} parent=15 // pred_fallthru
        _
    $region16: #{vision_processor_forward.3} parent=5 // pred_fallthru
      _
    %p169 = scmp.le.s32.totalorder 1, %s8
    %p170 = scmp.lt.s32.totalorder %s8, 9
    %p171 = pnand %p169, %p170
    %p172 = pneg %p171
    // Predicated region
    $region25: #{vision_processor_forward.3} parent=5 // pred_check
      _
    $region26: #{vision_processor_forward.3} parent=5 // pred_check_branch
      %174 = sbr.rel (%p171) target = $region28
    $region27: #{vision_processor_forward.3} parent=5 // pred_region
      %s175 = ssub.s32 %s8, 1
      %s176 = smul.u32 %s17, 4
      %s177 = sadd.s32 %s176, %s18
      %s178 = smul.u32 4, %s177
      %p179 = scmp.lt.s32.totalorder %s178, 31
      %s180 = scalar_select %p179, %s178, 31
      %s181 = smul.addr %s180, 4
      %s182 = scalar_lea.vmem %s0, %s181
      %p183 = pneg %p50
      %p184 = pneg %p47
      %s185 = smul.u32 %s17, 16
      %s186 = smul.u32 %s18, 4
      %s187 = ssub.s32 %s186, 1
      %p188 = scmp.gt.s32.totalorder %s187, 0
      %s189 = scalar_select %p188, %s187, 0
      %s190 = sadd.s32 %s185, %s189
      %p191 = scmp.lt.s32.totalorder %s190, 31
      %s192 = scalar_select %p191, %s190, 31
      %s193 = smul.addr %s192, 4
      %s194 = scalar_lea.vmem %s1, %s193
      %p195 = pneg %p88
      %p196 = pneg %p85
      %p197 = pneg %p118
      %p198 = pneg %p115
      %s199 = smul.u32 %s17, 4
      %s200 = sadd.s32 %s199, %s18
      %s201 = smul.u32 2, %s200
      %p202 = scmp.lt.s32.totalorder %s201, 15
      %s203 = scalar_select %p202, %s201, 15
      %s204 = smul.addr %s203, 4
      %s205 = scalar_lea.vmem %s2, %s204
      %s206 = smul.u32 %s17, 4
      %s207 = sadd.s32 %s206, %s18
      %s208 = smul.u32 4, %s207
      %p209 = scmp.lt.s32.totalorder %s208, 31
      %s210 = scalar_select %p209, %s208, 31
      %s211 = smul.addr %s210, 4
      %s212 = scalar_lea.vmem %s0, %s211
      %s213 = smul.u32 %s17, 4
      %s214 = sadd.s32 %s213, %s18
      %s215 = smul.u32 4, %s214
      %s216 = smul.u32 %s17, 16
      %s217 = smul.u32 %s18, 4
      %s218 = ssub.s32 %s217, 1
      %p219 = scmp.gt.s32.totalorder %s218, 0
      %s220 = scalar_select %p219, %s218, 0
      %s221 = sadd.s32 %s216, %s220
      %p222 = scmp.lt.s32.totalorder %s221, 31
      %s223 = scalar_select %p222, %s221, 31
      %s224 = smul.addr %s223, 4
      %s225 = scalar_lea.vmem %s1, %s224
      %s226 = smul.u32 %s17, 16
      %s227 = smul.u32 %s18, 4
      %s228 = ssub.s32 %s227, 1
      %p229 = scmp.gt.s32.totalorder %s228, 0
      %s230 = scalar_select %p229, %s228, 0
      %s231 = sadd.s32 %s226, %s230
      %s232 = smul.u32 %s17, 4
      %s233 = sadd.s32 %s232, %s18
      %s234 = smul.u32 2, %s233
      %p235 = scmp.lt.s32.totalorder %s234, 15
      %s236 = scalar_select %p235, %s234, 15
      %s237 = smul.addr %s236, 4
      %s238 = scalar_lea.vmem %s2, %s237
      %s239 = smul.u32 %s17, 4
      %s240 = sadd.s32 %s239, %s18
      %s241 = smul.u32 2, %s240
      %v242 = vld [vmem:[%s225] sm:$0xf]
      %v244 = vunpack.c.l.b16 %v242
      %v245 = vpack.c.b16 %v244, %v244
      %v247 = vshrl.u32 %v245, 16
      %v249 = vrot.slane %v247, 7
      %v250 = vshll.u32 %v245, 16
      %v252 = vor.u32 %v249, %v250
      %vm254 = vcmask 1040384
      %vm255 = vsmask.f32 256
      %vm256 = vmand %vm254, %vm255
      %v257 = vsel %vm256, %v242, %v252
      %v258 = vlaneseq
      %v259 = vshrl.u32 %v258, 7
      %vm260 = vcmp.lt.s32.totalorder %v259, 0
      %v261 = vsub.s32 0, %v259
      %v262 = vsel %vm260, %v261, %v259
      %v263 = vshrl.u32 %v262, 3
      %v264 = vand.u32 %v262, 7
      %v265 = vsub.s32 0, %v264
      %v266 = vsel %vm260, %v265, %v264
      %vm267 = vcmp.ne.s32.totalorder %v266, 0
      %vm268 = vcmp.lt.s32.totalorder %v266, 0
      %vm269 = vmand %vm268, %vm267
      %v270 = vadd.s32 %v266, 8
      %v271 = vsel %vm269, %v270, %v266
      %vm272 = vcmp.eq.s32.totalorder %v271, 0
      %v273 = vsel %vm272, 1, 0
      %vm274 = vcmp.eq.s32.totalorder %v273, 1
      %vm275 = vmpackc.low %vm274, %vm274
      %v277 = vunpack.c.l.b16 %v257
      %v278 = vpack.c.b16 %v277, %v277
      %279 = vrot.lane.b32.xlu0 %v278, 64
      %v280 = vpop.permute.xlu0 %279
      %v282 = vsel %vm275, %v242, %v280
      %284 = vrot.lane.b32.xlu0 %v282, 64
      %v285 = vpop.permute.xlu0 %284
      %v287 = vmax.bf16 %v242, %v285
      %289 = vrot.lane.b32.xlu0 %v287, 64
      %v290 = vpop.permute.xlu0 %289
      %v292 = vmax.bf16 %v242, %v290
      %vm293 = vcmask 519168
      %294 = vst.msk [vmem:[#allocation2] sm:$0xf] %vm293, %v292
      %v295 = vld [vmem:[%s212] sm:$0xf]
      %v296 = vld [vmem:[%s212 + $0x4] sm:$0xf]
      %v297 = vld [vmem:[%s212 + $0x8] sm:$0xf]
      %v298 = vld [vmem:[%s212 + $0xc] sm:$0xf]
      %v303 = vunpack.c.l.b16 %v295
      %v304 = vunpack.c.l.b16 %v296
      %v305 = vunpack.c.l.b16 %v297
      %v306 = vunpack.c.l.b16 %v298
      %v307 = vpack.c.b16 %v304, %v303
      %v308 = vpack.c.b16 %v306, %v305
      %v310 = vshrl.u32 %v307, 16
      %v312 = vrot.slane %v310, 7
      %v313 = vshll.u32 %v307, 16
      %v315 = vor.u32 %v312, %v313
      %v317 = vshrl.u32 %v308, 16
      %v319 = vrot.slane %v317, 7
      %v320 = vshll.u32 %v308, 16
      %v322 = vor.u32 %v319, %v320
      %v323 = vsel %vm255, %v312, %v322
      %v325 = vsel %vm256, %v295, %v315
      %v326 = vadd.s32 %v259, 8
      %v327 = vadd.s32 %v259, 16
      %v328 = vadd.s32 %v259, 24
      %vm329 = vcmp.lt.s32.totalorder %v326, 0
      %v330 = vsub.s32 0, %v326
      %v331 = vsel %vm329, %v330, %v326
      %v332 = vshrl.u32 %v331, 3
      %v333 = vand.u32 %v331, 7
      %v334 = vsub.s32 0, %v333
      %v335 = vsel %vm329, %v334, %v333
      %vm336 = vcmp.lt.s32.totalorder %v327, 0
      %v337 = vsub.s32 0, %v327
      %v338 = vsel %vm336, %v337, %v327
      %v339 = vshrl.u32 %v338, 3
      %v340 = vand.u32 %v338, 7
      %v341 = vsub.s32 0, %v340
      %v342 = vsel %vm336, %v341, %v340
      %vm343 = vcmp.lt.s32.totalorder %v328, 0
      %v344 = vsub.s32 0, %v328
      %v345 = vsel %vm343, %v344, %v328
      %v346 = vshrl.u32 %v345, 3
      %v347 = vand.u32 %v345, 7
      %v348 = vsub.s32 0, %v347
      %v349 = vsel %vm343, %v348, %v347
      %vm350 = vcmp.ne.s32.totalorder %v335, 0
      %vm351 = vcmp.ne.s32.totalorder %v342, 0
      %vm352 = vcmp.ne.s32.totalorder %v349, 0
      %vm353 = vcmp.lt.s32.totalorder %v335, 0
      %vm354 = vcmp.lt.s32.totalorder %v342, 0
      %vm355 = vcmp.lt.s32.totalorder %v349, 0
      %vm356 = vmand %vm353, %vm350
      %vm357 = vmand %vm354, %vm351
      %vm358 = vmand %vm355, %vm352
      %v359 = vadd.s32 %v335, 8
      %v360 = vadd.s32 %v342, 8
      %v361 = vadd.s32 %v349, 8
      %v362 = vsel %vm356, %v359, %v335
      %v363 = vsel %vm357, %v360, %v342
      %v364 = vsel %vm358, %v361, %v349
      %vm365 = vcmp.eq.s32.totalorder %v362, 0
      %vm366 = vcmp.eq.s32.totalorder %v363, 0
      %vm367 = vcmp.eq.s32.totalorder %v364, 0
      %v368 = vsel %vm365, 1, 0
      %v369 = vsel %vm366, 1, 0
      %v370 = vsel %vm367, 1, 0
      %vm371 = vcmp.eq.s32.totalorder %v368, 1
      %vm372 = vcmp.eq.s32.totalorder %v369, 1
      %vm373 = vcmp.eq.s32.totalorder %v370, 1
      %vm374 = vmpackc.low %vm371, %vm371
      %vm375 = vmpackc.low %vm372, %vm372
      %vm376 = vmpackc.low %vm373, %vm373
      %v378 = vunpack.c.l.b16 %v325
      %v379 = vunpack.c.h.b16 %v325
      %v380 = vunpack.c.l.b16 %v323
      %v381 = vunpack.c.h.b16 %v323
      %v382 = vpack.c.b16 %v378, %v378
      %v383 = vpack.c.b16 %v379, %v379
      %v384 = vpack.c.b16 %v380, %v380
      %v385 = vpack.c.b16 %v381, %v381
      %386 = vrot.lane.b32.xlu0 %v382, 64
      %v387 = vpop.permute.xlu0 %386
      %388 = vrot.lane.b32.xlu0 %v383, 64
      %v389 = vpop.permute.xlu0 %388
      %390 = vrot.lane.b32.xlu0 %v384, 64
      %v391 = vpop.permute.xlu0 %390
      %392 = vrot.lane.b32.xlu0 %v385, 64
      %v393 = vpop.permute.xlu0 %392
      %v398 = vsel %vm275, %v295, %v387
      %v399 = vsel %vm374, %v296, %v389
      %v400 = vsel %vm375, %v297, %v391
      %v401 = vsel %vm376, %v298, %v393
      %406 = vrot.lane.b32.xlu0 %v398, 64
      %v407 = vpop.permute.xlu0 %406
      %408 = vrot.lane.b32.xlu0 %v399, 64
      %v409 = vpop.permute.xlu0 %408
      %410 = vrot.lane.b32.xlu0 %v400, 64
      %v411 = vpop.permute.xlu0 %410
      %412 = vrot.lane.b32.xlu0 %v401, 64
      %v413 = vpop.permute.xlu0 %412
      %v418 = vmax.bf16 %v295, %v407
      %v419 = vmax.bf16 %v296, %v409
      %v420 = vmax.bf16 %v297, %v411
      %v421 = vmax.bf16 %v298, %v413
      %426 = vrot.lane.b32.xlu0 %v418, 64
      %v427 = vpop.permute.xlu0 %426
      %428 = vrot.lane.b32.xlu0 %v419, 64
      %v429 = vpop.permute.xlu0 %428
      %430 = vrot.lane.b32.xlu0 %v420, 64
      %v431 = vpop.permute.xlu0 %430
      %432 = vrot.lane.b32.xlu0 %v421, 64
      %v433 = vpop.permute.xlu0 %432
      %v438 = vmax.bf16 %v295, %v427
      %v439 = vmax.bf16 %v296, %v429
      %v440 = vmax.bf16 %v297, %v431
      %v441 = vmax.bf16 %v298, %v433
      %442 = vst.msk [vmem:[#allocation2 + $0x4] sm:$0xf] %vm293, %v438
      %443 = vst.msk [vmem:[#allocation2 + $0x8] sm:$0xf] %vm293, %v439
      %444 = vst.msk [vmem:[#allocation2 + $0xc] sm:$0xf] %vm293, %v440
      %445 = vst.msk [vmem:[#allocation2 + $0x10] sm:$0xf] %vm293, %v441
      %v446 = vld [vmem:[#allocation2] sm:$0xf]
      %v447 = vld [vmem:[#allocation2 + $0x4] sm:$0xf]
      %v448 = vld [vmem:[#allocation2 + $0x8] sm:$0xf]
      %v449 = vmax.bf16 %v447, %v448
      %v450 = vmax.bf16 %v446, %v449
      %451 = vst.msk [vmem:[%s238] sm:$0xf] %vm293, %v450
      %v452 = vld [vmem:[#allocation2 + $0x8] sm:$0xf]
      %v453 = vld [vmem:[#allocation2 + $0xc] sm:$0xf]
      %v454 = vld [vmem:[#allocation2 + $0x10] sm:$0xf]
      %v455 = vmax.bf16 %v453, %v454
      %v456 = vmax.bf16 %v452, %v455
      %457 = vst.msk [vmem:[%s238 + $0x4] sm:$0xf] %vm293, %v456
      %s458 = smul.u32 %s17, 4
      %s459 = sadd.s32 %s458, %s18
      %s460 = smul.u32 2, %s459
      %p461 = scmp.lt.s32.totalorder %s460, 15
      %s462 = scalar_select %p461, %s460, 15
      %s463 = smul.addr %s462, 4
      %s464 = scalar_lea.vmem %s2, %s463
      // Predicated region
      $region29: #{vision_processor_forward.3} parent=27 // pred_check
        %p465 = pneg %p115
      $region30: #{vision_processor_forward.3} parent=27 // pred_check_branch
        %467 = sbr.rel (%p465) target = $region32
      $region31: #{vision_processor_forward.3} parent=27 // pred_region
        %s468 = smul.u32 %s17, 4
        %s469 = sadd.s32 %s468, %s18
        %s470 = smul.u32 2, %s469
      $region32: #{vision_processor_forward.3} parent=27 // pred_fallthru
        _
    $region28: #{vision_processor_forward.3} parent=5 // pred_fallthru
      _
    %p471 = scmp.le.s32.totalorder 2, %s8
    // Predicated region
    $region33: #{vision_processor_forward.3} parent=5 // pred_check
      %p472 = pneg %p471
    $region34: #{vision_processor_forward.3} parent=5 // pred_check_branch
      %474 = sbr.rel (%p472) target = $region36
    $region35: #{vision_processor_forward.3} parent=5 // pred_region
      %s475 = ssub.s32 %s8, 2
      // Predicated region
      $region37: #{vision_processor_forward.3} parent=35 // pred_check
        %p476 = pneg %p121
      $region38: #{vision_processor_forward.3} parent=35 // pred_check_branch
        %478 = sbr.rel (%p476) target = $region40
      $region39: #{vision_processor_forward.3} parent=35 // pred_region
        %s479 = smul.u32 %s19, 4
        %s480 = sadd.s32 %s479, %s20
        %s481 = smul.u32 2, %s480
        %p482 = scmp.lt.s32.totalorder %s481, 15
        %s483 = scalar_select %p482, %s481, 15
        %s484 = smul.addr %s483, 4
        %s485 = scalar_lea.vmem %s2, %s484
      $region40: #{vision_processor_forward.3} parent=35 // pred_fallthru
        _
    $region36: #{vision_processor_forward.3} parent=5 // pred_fallthru
      _
  $region6: #{vision_processor_forward.3} parent=0 // loop_footer
    %s12 = sadd.s32 1, %s8
  $region7: #{vision_processor_forward.3} parent=0 // loop_footer_branch
    %7 = sbr.rel target = $region3
  $region8: #{vision_processor_forward.3} parent=0 // loop_exit
    _

// kernel: vision_processor_forward.2
$region0: #{vision_processor_forward.2}
  #allocation0 [shape = 'u32[]', space=smem, size = 0x4, offset = 0x4, fixed_abs, tag = 'smem constant byte address 0x4 - core index']
  #allocation1 [shape = 'u32[144,128]{1,0:T(1,128)}', space=vmem, size = 0x12000, scoped, tag = 'internal scratch']
  %s0 = inlined_call_operand.vmem [shape: bf16[256,294], index: 0, kind: input, shape index: {}]
  %s1 = inlined_call_operand.vmem [shape: bf16[294,128], index: 1, kind: input, shape index: {}]
  %s2 = inlined_call_operand.vmem [shape: f32[1,128], index: 2, kind: input, shape index: {}]
  %s3 = inlined_call_operand.vmem [shape: bf16[256,128], index: 3, kind: output, shape index: {}]
  %s4 = sld [smem:[#allocation0]]
  $region45: #{vision_processor_forward.2} parent=0
    _
  %s6 = ssub.s32 1, %s4
  %s7 = scalar_select 0, %s6, %s4
  loop: start=0, step=1, limit=6
  $region2: #{vision_processor_forward.2} parent=0 // loop_pre_header
    _
  $region3: #{vision_processor_forward.2} parent=0 // loop_header
    %s9 = sphi 0, %s13
    %p10 = scmp.ge.s32.totalorder %s9, 6
    %s19 = sphi 0, %s21
    %s22 = sphi 0, %s19
    %s23 = sphi 0, %s22
    %s39 = sphi 0, %s23
    %s43 = sphi 0, %s43
    %s45 = sphi 0, %s43
    %s46 = sphi 0, %s45
    %s60 = sphi 0, %s46
    %s64 = sphi 0, %s64
    %s66 = sphi 0, %s64
    %s67 = sphi 0, %s66
    %s81 = sphi 0, %s67
    %s87 = sphi 0, %s89
    %s90 = sphi 0, %s87
    %s91 = sphi 0, %s90
    %s107 = sphi 0, %s91
  $region4: #{vision_processor_forward.2} parent=0 // loop_header_branch
    %12 = sbr.rel (%p10) target = $region8
  $region5: #{vision_processor_forward.2} parent=0 // loop_body
    %s14 = ssub.s32 %s9, 1
    %s15 = ssub.s32 %s9, 2
    %s16 = sadd.s32 %s9, 1
    %s17 = ssub.s32 %s9, %s16
    %p18 = scmp.eq.s32.totalorder %s17, 0
    %s20 = sadd.s32 %s19, 1
    %s21 = scalar_select %p18, %s19, %s20
    %p24 = pneg %p18
    %p25 = scmp.eq.s32.totalorder %s9, 3
    %p26 = por %p24, %p25
    %p27 = scmp.ne.s32.totalorder %s19, %s22
    %p28 = scmp.eq.s32.totalorder %s9, 0
    %p29 = por %p27, %p28
    %p30 = scmp.ne.s32.totalorder %s19, %s22
    %p31 = scmp.eq.s32.totalorder %s14, 3
    %p32 = por %p30, %p31
    %p33 = scmp.ne.s32.totalorder %s22, %s23
    %p34 = scmp.eq.s32.totalorder %s14, 0
    %p35 = por %p33, %p34
    %p36 = scmp.ne.s32.totalorder %s22, %s23
    %p37 = scmp.eq.s32.totalorder %s15, 3
    %p38 = por %p36, %p37
    %p40 = scmp.ne.s32.totalorder %s23, %s39
    %p41 = scmp.eq.s32.totalorder %s15, 0
    %p42 = por %p40, %p41
    %s44 = sadd.s32 %s43, 1
    %p47 = scmp.eq.s32.totalorder %s9, 3
    %p48 = scmp.ne.s32.totalorder %s43, %s45
    %p49 = scmp.eq.s32.totalorder %s9, 0
    %p50 = por %p48, %p49
    %p51 = scmp.ne.s32.totalorder %s43, %s45
    %p52 = scmp.eq.s32.totalorder %s14, 3
    %p53 = por %p51, %p52
    %p54 = scmp.ne.s32.totalorder %s45, %s46
    %p55 = scmp.eq.s32.totalorder %s14, 0
    %p56 = por %p54, %p55
    %p57 = scmp.ne.s32.totalorder %s45, %s46
    %p58 = scmp.eq.s32.totalorder %s15, 3
    %p59 = por %p57, %p58
    %p61 = scmp.ne.s32.totalorder %s46, %s60
    %p62 = scmp.eq.s32.totalorder %s15, 0
    %p63 = por %p61, %p62
    %s65 = sadd.s32 %s64, 1
    %p68 = scmp.eq.s32.totalorder %s9, 3
    %p69 = scmp.ne.s32.totalorder %s64, %s66
    %p70 = scmp.eq.s32.totalorder %s9, 0
    %p71 = por %p69, %p70
    %p72 = scmp.ne.s32.totalorder %s64, %s66
    %p73 = scmp.eq.s32.totalorder %s14, 3
    %p74 = por %p72, %p73
    %p75 = scmp.ne.s32.totalorder %s66, %s67
    %p76 = scmp.eq.s32.totalorder %s14, 0
    %p77 = por %p75, %p76
    %p78 = scmp.ne.s32.totalorder %s66, %s67
    %p79 = scmp.eq.s32.totalorder %s15, 3
    %p80 = por %p78, %p79
    %p82 = scmp.ne.s32.totalorder %s67, %s81
    %p83 = scmp.eq.s32.totalorder %s15, 0
    %p84 = por %p82, %p83
    %s85 = ssub.s32 %s9, %s16
    %p86 = scmp.eq.s32.totalorder %s85, 0
    %s88 = sadd.s32 %s87, 1
    %s89 = scalar_select %p86, %s87, %s88
    %p92 = pneg %p86
    %p93 = scmp.eq.s32.totalorder %s9, 3
    %p94 = por %p92, %p93
    %p95 = scmp.ne.s32.totalorder %s87, %s90
    %p96 = scmp.eq.s32.totalorder %s9, 0
    %p97 = por %p95, %p96
    %p98 = scmp.ne.s32.totalorder %s87, %s90
    %p99 = scmp.eq.s32.totalorder %s14, 3
    %p100 = por %p98, %p99
    %p101 = scmp.ne.s32.totalorder %s90, %s91
    %p102 = scmp.eq.s32.totalorder %s14, 0
    %p103 = por %p101, %p102
    %p104 = scmp.ne.s32.totalorder %s90, %s91
    %p105 = scmp.eq.s32.totalorder %s15, 3
    %p106 = por %p104, %p105
    %p108 = scmp.ne.s32.totalorder %s91, %s107
    %p109 = scmp.eq.s32.totalorder %s15, 0
    %p110 = por %p108, %p109
    %p111 = scmp.le.s32.totalorder 1, %s9
    %p112 = scmp.lt.s32.totalorder %s9, 5
    %p113 = pnand %p111, %p112
    %p114 = pneg %p113
    // Predicated region
    $region9: #{vision_processor_forward.2} parent=5 // pred_check
      _
    $region10: #{vision_processor_forward.2} parent=5 // pred_check_branch
      %116 = sbr.rel (%p113) target = $region12
    $region11: #{vision_processor_forward.2} parent=5 // pred_region
      %s117 = ssub.s32 %s9, 1
      // Predicated region
      $region13: #{vision_processor_forward.2} parent=11 // pred_check
        %p118 = pneg %p56
      $region14: #{vision_processor_forward.2} parent=11 // pred_check_branch
        %120 = sbr.rel (%p118) target = $region16
      $region15: #{vision_processor_forward.2} parent=11 // pred_region
        _
      $region16: #{vision_processor_forward.2} parent=11 // pred_fallthru
        _
      // Predicated region
      $region17: #{vision_processor_forward.2} parent=11 // pred_check
        %p121 = pneg %p77
      $region18: #{vision_processor_forward.2} parent=11 // pred_check_branch
        %123 = sbr.rel (%p121) target = $region20
      $region19: #{vision_processor_forward.2} parent=11 // pred_region
        _
      $region20: #{vision_processor_forward.2} parent=11 // pred_fallthru
        _
    $region12: #{vision_processor_forward.2} parent=5 // pred_fallthru
      _
    %p124 = scmp.lt.s32.totalorder %s9, 4
    // Predicated region
    $region21: #{vision_processor_forward.2} parent=5 // pred_check
      %p125 = pneg %p124
    $region22: #{vision_processor_forward.2} parent=5 // pred_check_branch
      %127 = sbr.rel (%p125) target = $region24
    $region23: #{vision_processor_forward.2} parent=5 // pred_region
      // Predicated region
      $region25: #{vision_processor_forward.2} parent=23 // pred_check
        %p128 = pneg %p29
      $region26: #{vision_processor_forward.2} parent=23 // pred_check_branch
        %130 = sbr.rel (%p128) target = $region28
      $region27: #{vision_processor_forward.2} parent=23 // pred_region
        %s131 = smul.u32 8, %s9
        %p132 = scmp.lt.s32.totalorder %s131, 31
        %s133 = scalar_select %p132, %s131, 31
        %s134 = smul.addr %s133, 3
        %s135 = smul.addr %s134, 4
        %s136 = scalar_lea.vmem %s0, %s135
        %s137 = smul.u32 8, %s9
      $region28: #{vision_processor_forward.2} parent=23 // pred_fallthru
        _
    $region24: #{vision_processor_forward.2} parent=5 // pred_fallthru
      _
    %p138 = scmp.le.s32.totalorder 1, %s9
    %p139 = scmp.lt.s32.totalorder %s9, 5
    %p140 = pnand %p138, %p139
    %p141 = pneg %p140
    // Predicated region
    $region29: #{vision_processor_forward.2} parent=5 // pred_check
      _
    $region30: #{vision_processor_forward.2} parent=5 // pred_check_branch
      %143 = sbr.rel (%p140) target = $region32
    $region31: #{vision_processor_forward.2} parent=5 // pred_region
      %s144 = ssub.s32 %s9, 1
      %s145 = smul.u32 8, %s14
      %p146 = scmp.lt.s32.totalorder %s145, 31
      %s147 = scalar_select %p146, %s145, 31
      %s148 = smul.addr %s147, 3
      %s149 = smul.addr %s148, 4
      %s150 = scalar_lea.vmem %s0, %s149
      %p151 = pneg %p35
      %p152 = pneg %p32
      %p153 = pneg %p56
      %p154 = pneg %p53
      %p155 = pneg %p77
      %p156 = pneg %p74
      %p157 = pneg %p103
      %p158 = pneg %p100
      %s159 = smul.u32 8, %s14
      %p160 = scmp.lt.s32.totalorder %s159, 31
      %s161 = scalar_select %p160, %s159, 31
      %s162 = smul.addr %s161, 4
      %s163 = scalar_lea.vmem %s3, %s162
      %s164 = smul.u32 8, %s14
      %p165 = scmp.lt.s32.totalorder %s164, 31
      %s166 = scalar_select %p165, %s164, 31
      %s167 = smul.addr %s166, 3
      %s168 = smul.addr %s167, 4
      %s169 = scalar_lea.vmem %s0, %s168
      %s170 = smul.u32 8, %s14
      %s171 = smul.u32 8, %s14
      %p172 = scmp.lt.s32.totalorder %s171, 31
      %s173 = scalar_select %p172, %s171, 31
      %s174 = smul.addr %s173, 4
      %s175 = scalar_lea.vmem %s3, %s174
      %s176 = smul.u32 8, %s14
      %v178 = vld [vmem:[%s169] sm:$0xff]
      %v179 = vld [vmem:[%s169 + $0x8] sm:$0xf]
      %v180 = vld [vmem:[%s169 + $0xc] sm:$0xff]
      %v181 = vld [vmem:[%s169 + $0x14] sm:$0xf]
      %v182 = vld [vmem:[%s169 + $0x18] sm:$0xff]
      %v183 = vld [vmem:[%s169 + $0x20] sm:$0xf]
      %v184 = vld [vmem:[%s169 + $0x24] sm:$0xff]
      %v185 = vld [vmem:[%s169 + $0x2c] sm:$0xf]
      %v186 = vld [vmem:[%s169 + $0x30] sm:$0xff]
      %v187 = vld [vmem:[%s169 + $0x38] sm:$0xf]
      %v188 = vld [vmem:[%s169 + $0x3c] sm:$0xff]
      %v189 = vld [vmem:[%s169 + $0x44] sm:$0xf]
      %v190 = vld [vmem:[%s169 + $0x48] sm:$0xff]
      %v191 = vld [vmem:[%s169 + $0x50] sm:$0xf]
      %v192 = vld [vmem:[%s169 + $0x54] sm:$0xff]
      %v193 = vld [vmem:[%s169 + $0x5c] sm:$0xf]
      %v194 = vld [vmem:[%s1] sm:$0xf]
      %v195 = vld [vmem:[%s1 + $0x4] sm:$0xf]
      %v196 = vld [vmem:[%s1 + $0x8] sm:$0xf]
      %v197 = vld [vmem:[%s1 + $0xc] sm:$0xf]
      %v198 = vld [vmem:[%s1 + $0x10] sm:$0xf]
      %v199 = vld [vmem:[%s1 + $0x14] sm:$0xf]
      %v200 = vld [vmem:[%s1 + $0x18] sm:$0xf]
      %v201 = vld [vmem:[%s1 + $0x1c] sm:$0xf]
      %v202 = vld [vmem:[%s1 + $0x20] sm:$0xf]
      %v203 = vld [vmem:[%s1 + $0x24] sm:$0xf]
      %v204 = vld [vmem:[%s1 + $0x28] sm:$0xf]
      %v205 = vld [vmem:[%s1 + $0x2c] sm:$0xf]
      %v206 = vld [vmem:[%s1 + $0x30] sm:$0xf]
      %v207 = vld [vmem:[%s1 + $0x34] sm:$0xf]
      %v208 = vld [vmem:[%s1 + $0x38] sm:$0xf]
      %v209 = vld [vmem:[%s1 + $0x3c] sm:$0xf]
      %v210 = vld [vmem:[%s1 + $0x40] sm:$0xf]
      %v211 = vld [vmem:[%s1 + $0x44] sm:$0xf]
      %v212 = vld [vmem:[%s1 + $0x48] sm:$0xf]
      %v213 = vld [vmem:[%s1 + $0x4c] sm:$0xf]
      %v214 = vld [vmem:[%s1 + $0x50] sm:$0xf]
      %v215 = vld [vmem:[%s1 + $0x54] sm:$0xf]
      %v216 = vld [vmem:[%s1 + $0x58] sm:$0xf]
      %v217 = vld [vmem:[%s1 + $0x5c] sm:$0xf]
      %v218 = vld [vmem:[%s1 + $0x60] sm:$0xf]
      %v219 = vld [vmem:[%s1 + $0x64] sm:$0xf]
      %v220 = vld [vmem:[%s1 + $0x68] sm:$0xf]
      %v221 = vld [vmem:[%s1 + $0x6c] sm:$0xf]
      %v222 = vld [vmem:[%s1 + $0x70] sm:$0xf]
      %v223 = vld [vmem:[%s1 + $0x74] sm:$0xf]
      %v224 = vld [vmem:[%s1 + $0x78] sm:$0xf]
      %v225 = vld [vmem:[%s1 + $0x7c] sm:$0xf]
      %v226 = vld [vmem:[%s1 + $0x80] sm:$0xf]
      %v227 = vld [vmem:[%s1 + $0x84] sm:$0xf]
      %v228 = vld [vmem:[%s1 + $0x88] sm:$0xf]
      %v229 = vld [vmem:[%s1 + $0x8c] sm:$0xf]
      %v230 = vld [vmem:[%s1 + $0x90] sm:$0x7]
      %v231 = vld [vmem:[%s2] sm:$0x1]
      %v233 = vlaneseq
      %v234 = vshrl.u32 %v233, 7
      %v235 = vsub.s32 0, %v234
      %v236 = vrot.slane %v231, %v235
      %v254 = vunpack.c.l.b16 %v178
      %v255 = vunpack.c.h.b16 %v178
      %v256 = vunpack.c.l.b16 %v179
      %v257 = vunpack.c.l.b16 %v180
      %v258 = vunpack.c.h.b16 %v180
      %v259 = vunpack.c.l.b16 %v181
      %v260 = vunpack.c.l.b16 %v182
      %v261 = vunpack.c.h.b16 %v182
      %v262 = vunpack.c.l.b16 %v183
      %v263 = vunpack.c.l.b16 %v184
      %v264 = vunpack.c.h.b16 %v184
      %v265 = vunpack.c.l.b16 %v185
      %v266 = vunpack.c.l.b16 %v186
      %v267 = vunpack.c.h.b16 %v186
      %v268 = vunpack.c.l.b16 %v187
      %v269 = vunpack.c.l.b16 %v188
      %v270 = vunpack.c.h.b16 %v188
      %v271 = vunpack.c.l.b16 %v189
      %v272 = vunpack.c.l.b16 %v190
      %v273 = vunpack.c.h.b16 %v190
      %v274 = vunpack.c.l.b16 %v191
      %v275 = vunpack.c.l.b16 %v192
      %v276 = vunpack.c.h.b16 %v192
      %v277 = vunpack.c.l.b16 %v193
      %v278 = vpack.c.b16 %v257, %v254
      %v279 = vpack.c.b16 %v258, %v255
      %v280 = vpack.c.b16 %v259, %v256
      %v281 = vpack.c.b16 %v263, %v260
      %v282 = vpack.c.b16 %v264, %v261
      %v283 = vpack.c.b16 %v265, %v262
      %v284 = vpack.c.b16 %v269, %v266
      %v285 = vpack.c.b16 %v270, %v267
      %v286 = vpack.c.b16 %v271, %v268
      %v287 = vpack.c.b16 %v275, %v272
      %v288 = vpack.c.b16 %v276, %v273
      %v289 = vpack.c.b16 %v277, %v274
      %v335 = vunpack.c.l.b16 %v194
      %v336 = vunpack.c.l.b16 %v195
      %v337 = vunpack.c.l.b16 %v196
      %v338 = vunpack.c.l.b16 %v197
      %v339 = vunpack.c.l.b16 %v198
      %v340 = vunpack.c.l.b16 %v199
      %v341 = vunpack.c.l.b16 %v200
      %v342 = vunpack.c.l.b16 %v201
      %v343 = vunpack.c.l.b16 %v202
      %v344 = vunpack.c.l.b16 %v203
      %v345 = vunpack.c.l.b16 %v204
      %v346 = vunpack.c.l.b16 %v205
      %v347 = vunpack.c.l.b16 %v206
      %v348 = vunpack.c.l.b16 %v207
      %v349 = vunpack.c.l.b16 %v208
      %v350 = vunpack.c.l.b16 %v209
      %v351 = vunpack.c.l.b16 %v210
      %v352 = vunpack.c.l.b16 %v211
      %v353 = vunpack.c.l.b16 %v212
      %v354 = vunpack.c.l.b16 %v213
      %v355 = vunpack.c.l.b16 %v214
      %v356 = vunpack.c.l.b16 %v215
      %v357 = vunpack.c.l.b16 %v216
      %v358 = vunpack.c.l.b16 %v217
      %v359 = vunpack.c.l.b16 %v218
      %v360 = vunpack.c.l.b16 %v219
      %v361 = vunpack.c.l.b16 %v220
      %v362 = vunpack.c.l.b16 %v221
      %v363 = vunpack.c.l.b16 %v222
      %v364 = vunpack.c.l.b16 %v223
      %v365 = vunpack.c.l.b16 %v224
      %v366 = vunpack.c.l.b16 %v225
      %v367 = vunpack.c.l.b16 %v226
      %v368 = vunpack.c.l.b16 %v227
      %v369 = vunpack.c.l.b16 %v228
      %v370 = vunpack.c.l.b16 %v229
      %v371 = vunpack.c.l.b16 %v230
      %v372 = vpack.c.b16 %v336, %v335
      %v373 = vpack.c.b16 %v338, %v337
      %v374 = vpack.c.b16 %v340, %v339
      %v375 = vpack.c.b16 %v342, %v341
      %v376 = vpack.c.b16 %v344, %v343
      %v377 = vpack.c.b16 %v346, %v345
      %v378 = vpack.c.b16 %v348, %v347
      %v379 = vpack.c.b16 %v350, %v349
      %v380 = vpack.c.b16 %v352, %v351
      %v381 = vpack.c.b16 %v354, %v353
      %v382 = vpack.c.b16 %v356, %v355
      %v383 = vpack.c.b16 %v358, %v357
      %v384 = vpack.c.b16 %v360, %v359
      %v385 = vpack.c.b16 %v362, %v361
      %v386 = vpack.c.b16 %v364, %v363
      %v387 = vpack.c.b16 %v366, %v365
      %v388 = vpack.c.b16 %v368, %v367
      %v389 = vpack.c.b16 %v370, %v369
      %v390 = vpack.c.b16 %v371, %v371
      %vm409 = vcmask 310272
      %v411 = vsel %vm409, %v280, 0
      %v414 = vsel %vm409, %v283, 0
      %v417 = vsel %vm409, %v286, 0
      %v420 = vsel %vm409, %v289, 0
      %vm422 = vcmask 1042432
      %v424 = vsel %vm422, %v390, 0
      %426 = vmatprep.subr.bf16.mxu0 0
      %427 = vmatpush1.bf16.msra.mxu0 %v372
      %428 = vmatprep.subr.bf16.mxu0 0
      %429 = vmatpush1.bf16.msra.mxu0 %v373
      %430 = vmatprep.subr.bf16.mxu0 0
      %431 = vmatpush1.bf16.msra.mxu0 %v374
      %432 = vmatprep.subr.bf16.mxu0 0
      %433 = vmatpush1.bf16.msra.mxu0 %v375
      %434 = vmatprep.subr.bf16.mxu0 0
      %435 = vmatpush1.bf16.msra.mxu0 %v376
      %436 = vmatprep.subr.bf16.mxu0 0
      %437 = vmatpush1.bf16.msra.mxu0 %v377
      %438 = vmatprep.subr.bf16.mxu0 0
      %439 = vmatpush1.bf16.msra.mxu0 %v378
      %440 = vmatprep.subr.bf16.mxu0 0
      %441 = vmatpush1.bf16.msra.mxu0 %v379
      %442 = vmatprep.subr.bf16.mxu0 0
      %443 = vmatpush1.bf16.msra.mxu0 %v380
      %444 = vmatprep.subr.bf16.mxu0 0
      %445 = vmatpush1.bf16.msra.mxu0 %v381
      %446 = vmatprep.subr.bf16.mxu0 0
      %447 = vmatpush1.bf16.msra.mxu0 %v382
      %448 = vmatprep.subr.bf16.mxu0 0
      %449 = vmatpush1.bf16.msra.mxu0 %v383
      %450 = vmatprep.subr.bf16.mxu0 0
      %451 = vmatpush1.bf16.msra.mxu0 %v384
      %452 = vmatprep.subr.bf16.mxu0 0
      %453 = vmatpush1.bf16.msra.mxu0 %v385
      %454 = vmatprep.subr.bf16.mxu0 0
      %455 = vmatpush1.bf16.msra.mxu0 %v386
      %456 = vmatprep.subr.bf16.mxu0 0
      %457 = vmatpush1.bf16.msra.mxu0 %v387
      %458 = vmatprep.mubr.bf16.mxu0 %v279
      %459 = vmatmul.mubr.bf16.gmra.mrb[0].mxu0 %v278
      %v460 = vpop.f32.mrb[0].mxu0
      %v461 = vadd.f32 %v236, %v460
      %v462 = vpop.f32.mrb[0].mxu0
      %v463 = vpop.f32.mrb[0].mxu0
      %v464 = vadd.f32 %v236, %v463
      %v465 = vpop.f32.mrb[0].mxu0
      %466 = vmatprep.mubr.bf16.mxu0 %v282
      %467 = vmatmul.mubr.bf16.gmra.mrb[0].mxu0 %v281
      %v468 = vpop.f32.mrb[0].mxu0
      %v469 = vadd.f32 %v236, %v468
      %v470 = vpop.f32.mrb[0].mxu0
      %v471 = vpop.f32.mrb[0].mxu0
      %v472 = vadd.f32 %v236, %v471
      %v473 = vpop.f32.mrb[0].mxu0
      %474 = vmatprep.mubr.bf16.mxu0 %v285
      %475 = vmatmul.mubr.bf16.gmra.mrb[0].mxu0 %v284
      %v476 = vpop.f32.mrb[0].mxu0
      %v477 = vadd.f32 %v236, %v476
      %v478 = vpop.f32.mrb[0].mxu0
      %v479 = vpop.f32.mrb[0].mxu0
      %v480 = vadd.f32 %v236, %v479
      %v481 = vpop.f32.mrb[0].mxu0
      %482 = vmatprep.mubr.bf16.mxu0 %v288
      %483 = vmatmul.mubr.bf16.gmra.mrb[0].mxu0 %v287
      %v484 = vpop.f32.mrb[0].mxu0
      %v485 = vadd.f32 %v236, %v484
      %v486 = vpop.f32.mrb[0].mxu0
      %v487 = vpop.f32.mrb[0].mxu0
      %v488 = vadd.f32 %v236, %v487
      %v489 = vpop.f32.mrb[0].mxu0
      %490 = vdwg.mxu0
      %491 = vmatprep.subr.bf16.mxu0 0
      %492 = vmatpush1.bf16.msra.mxu0 %v388
      %493 = vmatprep.subr.bf16.mxu0 0
      %494 = vmatpush1.bf16.msra.mxu0 %v389
      %495 = vmatprep.subr.bf16.mxu0 0
      %496 = vmatpush1.bf16.msra.mxu0 %v424
      %497 = vmatprep.subr.bf16.mxu0 0
      %498 = vmatpush1.bf16.msra.mxu0 0
      %499 = vmatprep.subr.bf16.mxu0 0
      %500 = vmatpush1.bf16.msra.mxu0 0
      %501 = vmatprep.subr.bf16.mxu0 0
      %502 = vmatpush1.bf16.msra.mxu0 0
      %503 = vmatprep.subr.bf16.mxu0 0
      %504 = vmatpush1.bf16.msra.mxu0 0
      %505 = vmatprep.subr.bf16.mxu0 0
      %506 = vmatpush1.bf16.msra.mxu0 0
      %507 = vmatprep.subr.bf16.mxu0 0
      %508 = vmatpush1.bf16.msra.mxu0 0
      %509 = vmatprep.subr.bf16.mxu0 0
      %510 = vmatpush1.bf16.msra.mxu0 0
      %511 = vmatprep.subr.bf16.mxu0 0
      %512 = vmatpush1.bf16.msra.mxu0 0
      %513 = vmatprep.subr.bf16.mxu0 0
      %514 = vmatpush1.bf16.msra.mxu0 0
      %515 = vmatprep.subr.bf16.mxu0 0
      %516 = vmatpush1.bf16.msra.mxu0 0
      %517 = vmatprep.subr.bf16.mxu0 0
      %518 = vmatpush1.bf16.msra.mxu0 0
      %519 = vmatprep.subr.bf16.mxu0 0
      %520 = vmatpush1.bf16.msra.mxu0 0
      %521 = vmatprep.subr.bf16.mxu0 0
      %522 = vmatpush1.bf16.msra.mxu0 0
      %523 = vmatprep.mubr.bf16.mxu0 0
      %524 = vmatmul.mubr.bf16.gmra.mrb[0].mxu0 %v411
      %v525 = vpop.f32.mrb[0].mxu0
      %v526 = vadd.f32 %v461, %v525
      %v527 = vpop.f32.mrb[0].mxu0
      %v528 = vpop.f32.mrb[0].mxu0
      %v529 = vadd.f32 %v464, %v528
      %v530 = vpop.f32.mrb[0].mxu0
      %531 = vmatprep.mubr.bf16.mxu0 0
      %532 = vmatmul.mubr.bf16.gmra.mrb[0].mxu0 %v414
      %v533 = vpop.f32.mrb[0].mxu0
      %v534 = vadd.f32 %v469, %v533
      %v535 = vpop.f32.mrb[0].mxu0
      %v536 = vpop.f32.mrb[0].mxu0
      %v537 = vadd.f32 %v472, %v536
      %v538 = vpop.f32.mrb[0].mxu0
      %539 = vmatprep.mubr.bf16.mxu0 0
      %540 = vmatmul.mubr.bf16.gmra.mrb[0].mxu0 %v417
      %v541 = vpop.f32.mrb[0].mxu0
      %v542 = vadd.f32 %v477, %v541
      %v543 = vpop.f32.mrb[0].mxu0
      %v544 = vpop.f32.mrb[0].mxu0
      %v545 = vadd.f32 %v480, %v544
      %v546 = vpop.f32.mrb[0].mxu0
      %547 = vmatprep.mubr.bf16.mxu0 0
      %548 = vmatmul.mubr.bf16.gmra.mrb[0].mxu0 %v420
      %v549 = vpop.f32.mrb[0].mxu0
      %v550 = vadd.f32 %v485, %v549
      %v551 = vpop.f32.mrb[0].mxu0
      %v552 = vpop.f32.mrb[0].mxu0
      %v553 = vadd.f32 %v488, %v552
      %v554 = vpop.f32.mrb[0].mxu0
      %555 = vdwg.mxu0
      %v556 = vmax.f32 %v526, 0.0
      %v557 = vmax.f32 %v529, 0.0
      %v558 = vmax.f32 %v534, 0.0
      %v559 = vmax.f32 %v537, 0.0
      %v560 = vmax.f32 %v542, 0.0
      %v561 = vmax.f32 %v545, 0.0
      %v562 = vmax.f32 %v550, 0.0
      %v563 = vmax.f32 %v553, 0.0
      %v564 = vpack.c.bf16 %v557, %v556
      %v565 = vpack.c.bf16 %v559, %v558
      %v566 = vpack.c.bf16 %v561, %v560
      %v567 = vpack.c.bf16 %v563, %v562
      %v572 = vunpack.c.l.b16 %v564
      %v573 = vunpack.c.h.b16 %v564
      %v574 = vunpack.c.l.b16 %v565
      %v575 = vunpack.c.h.b16 %v565
      %v576 = vunpack.c.l.b16 %v566
      %v577 = vunpack.c.h.b16 %v566
      %v578 = vunpack.c.l.b16 %v567
      %v579 = vunpack.c.h.b16 %v567
      %v580 = vpack.c.b16 %v572, %v572
      %v581 = vpack.c.b16 %v573, %v573
      %v582 = vpack.c.b16 %v574, %v574
      %v583 = vpack.c.b16 %v575, %v575
      %v584 = vpack.c.b16 %v576, %v576
      %v585 = vpack.c.b16 %v577, %v577
      %v586 = vpack.c.b16 %v578, %v578
      %v587 = vpack.c.b16 %v579, %v579
      %596 = vst [vmem:[%s175] sm:$0xf] %v580
      %597 = vst [vmem:[%s175 + $0x4] sm:$0xf] %v581
      %598 = vst [vmem:[%s175 + $0x8] sm:$0xf] %v582
      %599 = vst [vmem:[%s175 + $0xc] sm:$0xf] %v583
      %600 = vst [vmem:[%s175 + $0x10] sm:$0xf] %v584
      %601 = vst [vmem:[%s175 + $0x14] sm:$0xf] %v585
      %602 = vst [vmem:[%s175 + $0x18] sm:$0xf] %v586
      %603 = vst [vmem:[%s175 + $0x1c] sm:$0xf] %v587
      %s604 = smul.u32 8, %s14
      %p605 = scmp.lt.s32.totalorder %s604, 31
      %s606 = scalar_select %p605, %s604, 31
      %s607 = smul.addr %s606, 4
      %s608 = scalar_lea.vmem %s3, %s607
      // Predicated region
      $region33: #{vision_processor_forward.2} parent=31 // pred_check
        %p609 = pneg %p100
      $region34: #{vision_processor_forward.2} parent=31 // pred_check_branch
        %611 = sbr.rel (%p609) target = $region36
      $region35: #{vision_processor_forward.2} parent=31 // pred_region
        %s612 = smul.u32 8, %s14
      $region36: #{vision_processor_forward.2} parent=31 // pred_fallthru
        _
    $region32: #{vision_processor_forward.2} parent=5 // pred_fallthru
      _
    %p613 = scmp.le.s32.totalorder 2, %s9
    // Predicated region
    $region37: #{vision_processor_forward.2} parent=5 // pred_check
      %p614 = pneg %p613
    $region38: #{vision_processor_forward.2} parent=5 // pred_check_branch
      %616 = sbr.rel (%p614) target = $region40
    $region39: #{vision_processor_forward.2} parent=5 // pred_region
      %s617 = ssub.s32 %s9, 2
      // Predicated region
      $region41: #{vision_processor_forward.2} parent=39 // pred_check
        %p618 = pneg %p106
      $region42: #{vision_processor_forward.2} parent=39 // pred_check_branch
        %620 = sbr.rel (%p618) target = $region44
      $region43: #{vision_processor_forward.2} parent=39 // pred_region
        %s621 = smul.u32 8, %s15
        %p622 = scmp.lt.s32.totalorder %s621, 31
        %s623 = scalar_select %p622, %s621, 31
        %s624 = smul.addr %s623, 4
        %s625 = scalar_lea.vmem %s3, %s624
      $region44: #{vision_processor_forward.2} parent=39 // pred_fallthru
        _
    $region40: #{vision_processor_forward.2} parent=5 // pred_fallthru
      _
  $region6: #{vision_processor_forward.2} parent=0 // loop_footer
    %s13 = sadd.s32 1, %s9
  $region7: #{vision_processor_forward.2} parent=0 // loop_footer_branch
    %8 = sbr.rel target = $region3
  $region8: #{vision_processor_forward.2} parent=0 // loop_exit
    _

</llo_original>
